<compile_context>
chip_gen: v5e
topology: v5e:2x2
jax: 0.10.0
libtpu: 0.0.40
codegen_flags: <defaults>
</compile_context>

<pallas_src>
import jax
import jax.numpy as jnp
import numpy as np
from jax.experimental import pallas as pl
from jax.experimental.pallas import tpu as pltpu


def _attn_span_kernel(amask_ref, wbig_ref, spans_ref, out_ref, wts_ref):
    # amask_ref : (TM, S)    f32 additive mask ((mask-1)*1e10), broadcast over layers
    # wbig_ref  : (S*D, S)   block-diagonal Linear weight, in spans dtype
    # spans_ref : (TM, S*D)  spans tile, S merged into the lane axis (lane-dense)
    # out_ref   : (TM, D)    f32 pooled output (dense store)
    # wts_ref   : (TM, S)    f32 attention weights (module's last_attention_wts)
    x = spans_ref[...]                                    # (TM, S*D), input dtype
    d = out_ref.shape[1]
    s = wts_ref.shape[1]

    # Attention logits on the MXU: the block-diagonal weight keeps each span
    # position contracting only with its own D-slice; f32 accumulation.
    logits = jnp.dot(x, wbig_ref[...], preferred_element_type=jnp.float32)
    logits = logits + amask_ref[...]                      # (TM, S)

    # Numerically stable softmax over S (tiny lane axis), exact division, f32.
    m = jnp.max(logits, axis=-1, keepdims=True)           # (TM, 1)
    e = jnp.exp(logits - m)                                # (TM, S)
    wts = e / jnp.sum(e, axis=-1, keepdims=True)           # (TM, S) f32
    wts_ref[...] = wts

    # Attention pooling: S unrolled VPU FMAs over lane-aligned (TM, D) slices,
    # with the softmax weights kept in f32.
    acc = wts[:, 0:1] * x[:, 0:d].astype(jnp.float32)
    for si in range(1, s):
        acc = acc + wts[:, si:si + 1] * x[:, si * d:(si + 1) * d].astype(jnp.float32)
    out_ref[...] = acc                                     # (TM, D) f32


def _round_up(x, m):
    return (x + m - 1) // m * m


def attn_span_repr(spans, attention_mask, weight, bias=None, *,
                   block_bytes=8 * 1024 * 1024, return_attention_wts=False):
    """spans: (B, L, S, D); attention_mask: (B, S); weight: (1, D); bias: (1,).

    Returns float32 (B, L, D) (and optionally the (B, L, S) attention weights).
    `bias` is accepted for API parity but is an exact no-op under the softmax
    over S (shift invariance), so it is dropped.  spans may be float32 or
    bfloat16; bf16 halves HBM traffic of this memory-bound kernel.
    Keep `block_bytes` <= ~12 MiB when targeting v7x (64 MiB physical VMEM).
    """
    B, L, S, D = spans.shape
    R = B * L
    itemsize = spans.dtype.itemsize
    row_bytes = S * D * itemsize

    # Row tile: as many rows per grid step as fit ~block_bytes of spans
    # (multi-MiB tiles -> few grid steps, near the HBM roofline).  Balance the
    # tile across steps so end-of-rows padding stays minimal.
    budget_rows = max(8, (block_bytes // row_bytes) // 8 * 8)
    if R <= budget_rows:
        tm = _round_up(R, 8)
    else:
        n_steps = -(-R // budget_rows)
        tm = _round_up(-(-R // n_steps), 8)
    r_pad = _round_up(R, tm)

    # (B, L, S, D) -> (R, S*D): free row-major view; pad rows once at the end.
    spans2 = spans.reshape(R, S * D)
    if r_pad != R:
        spans2 = jnp.pad(spans2, ((0, r_pad - R), (0, 0)))

    # Additive mask precomputed in f32, broadcast over layers: (R_pad, S), tiny.
    amask = (attention_mask.astype(jnp.float32) - 1.0) * 10000000000.0     # (B, S)
    amask = jnp.broadcast_to(amask[:, None, :], (B, L, S)).reshape(R, S)
    if r_pad != R:
        amask = jnp.pad(amask, ((0, r_pad - R), (0, 0)))   # padded rows: uniform wts, spans=0

    # Block-diagonal attention weight (S*D, S): wbig[s*D + d, s] = weight[d].
    w = weight.reshape(D).astype(spans.dtype)
    wbig = (jnp.eye(S, dtype=spans.dtype)[:, None, :] * w[None, :, None]).reshape(S * D, S)
    # nn.Linear bias is constant along S -> exact no-op under the softmax; dropped.

    grid = (r_pad // tm,)
    vmem_need = (2 * tm * S * D * itemsize      # spans (double-buffered)
                 + 2 * tm * D * 4               # pooled output
                 + 4 * tm * S * 4               # mask + wts output
                 + 2 * S * D * S * itemsize)    # block-diagonal weight
    vmem_limit = int(min(max(32 << 20, vmem_need + (4 << 20)), 100 << 20))

    out, wts = pl.pallas_call(
        _attn_span_kernel,
        out_shape=(jax.ShapeDtypeStruct((r_pad, D), jnp.float32),
                   jax.ShapeDtypeStruct((r_pad, S), jnp.float32)),
        grid_spec=pltpu.PrefetchScalarGridSpec(
            num_scalar_prefetch=0,
            grid=grid,
            in_specs=[
                pl.BlockSpec((tm, S), lambda i: (i, 0)),          # additive mask
                pl.BlockSpec((S * D, S), lambda i: (0, 0)),       # block-diag weight
                pl.BlockSpec((tm, S * D), lambda i: (i, 0)),      # spans tile (lane-dense)
            ],
            out_specs=[
                pl.BlockSpec((tm, D), lambda i: (i, 0)),          # pooled, dense store
                pl.BlockSpec((tm, S), lambda i: (i, 0)),          # attention weights
            ],
        ),
        compiler_params=pltpu.CompilerParams(
            dimension_semantics=("parallel",),
            vmem_limit_bytes=vmem_limit),
    )(amask, wbig, spans2)

    pooled = out[:R].reshape(B, L, D)
    if return_attention_wts:
        return pooled, wts[:R].reshape(B, L, S)
    return pooled


def _reference(spans, attention_mask, weight, bias):
    """Plain-JAX mirror of the PyTorch broadcasting (f32 math)."""
    sp = spans.astype(jnp.float32)
    w = weight.reshape(-1).astype(jnp.float32)
    logits = jnp.einsum("blsd,d->bls", sp, w)[..., None] + bias.reshape(()).astype(jnp.float32)
    mask = attention_mask.astype(jnp.float32)[:, None, :, None]
    logits = logits + (-10000000000.0) * (1.0 - mask)
    wts = jax.nn.softmax(logits, axis=-2)
    return jnp.sum(wts * sp, axis=-2), wts[..., 0]


if __name__ == "__main__":
    # Small shapes consistent with the module docstring ([B, L, S, D] ~ [32, 13, 4, 256]).
    B, L, S, D = 2, 13, 4, 256
    key = jax.random.PRNGKey(0)
    k1, k2, k3, k4 = jax.random.split(key, 4)

    spans = jax.random.normal(k1, (B, L, S, D), dtype=jnp.float32)
    attention_mask = (jax.random.uniform(k2, (B, S)) > 0.3).astype(jnp.float32)
    attention_mask = attention_mask.at[:, 0].set(1.0)   # at least one valid token per span

    # Deterministic nn.Linear(D, 1) params (PyTorch-style uniform bound).
    bound = 1.0 / float(np.sqrt(D))
    weight = jax.random.uniform(k3, (1, D), minval=-bound, maxval=bound, dtype=jnp.float32)
    bias = jax.random.uniform(k4, (1,), minval=-bound, maxval=bound, dtype=jnp.float32)

    # float32 spans path (matches the PyTorch module dtype); also check attention wts.
    out, wts = attn_span_repr(spans, attention_mask, weight, bias, return_attention_wts=True)
    out = jax.block_until_ready(out)
    assert out.shape == (B, L, D) and out.dtype == jnp.float32
    ref_out, ref_wts = _reference(spans, attention_mask, weight, bias)
    np.testing.assert_allclose(np.asarray(out), np.asarray(ref_out), rtol=2e-3, atol=2e-3)
    np.testing.assert_allclose(np.asarray(wts), np.asarray(ref_wts), rtol=2e-3, atol=2e-3)

    # bfloat16 spans path: half the HBM traffic; softmax/pooling math stays f32 in-kernel.
    spans_bf16 = spans.astype(jnp.bfloat16)
    out_bf16 = jax.block_until_ready(attn_span_repr(spans_bf16, attention_mask, weight, bias))
    ref_bf16, _ = _reference(spans_bf16, attention_mask, weight, bias)
    np.testing.assert_allclose(np.asarray(out_bf16), np.asarray(ref_bf16), rtol=3e-2, atol=3e-2)

    print("KERNEL_OK")
</pallas_src>

<mosaic_0001>
module attributes {stable_mosaic.version = 11 : i64} {
  func.func @_attn_span_kernel(%arg0: i32, %arg1: memref<32x4xf32, #tpu.memory_space<vmem>>, %arg2: memref<1024x4xf32, #tpu.memory_space<vmem>>, %arg3: memref<32x1024xf32, #tpu.memory_space<vmem>>, %arg4: memref<32x256xf32, #tpu.memory_space<vmem>>, %arg5: memref<32x4xf32, #tpu.memory_space<vmem>>) attributes {dimension_semantics = [#tpu.dimension_semantics<parallel>], iteration_bounds = array<i64: 1>, scalar_prefetch = 0 : i64, scratch_operands = 0 : i64, tpu.core_type = #tpu.core_type<tc>, window_params = [{transform_indices = @transform_0, window_bounds = array<i64: 32, 4>}, {pipeline_mode = #tpu.pipeline_mode<synchronous>, transform_indices = @transform_1, window_bounds = array<i64: 1024, 4>}, {transform_indices = @transform_2, window_bounds = array<i64: 32, 1024>}, {transform_indices = @transform_3, window_bounds = array<i64: 32, 256>}, {transform_indices = @transform_4, window_bounds = array<i64: 32, 4>}]} {
    %c0 = arith.constant 0 : index
    %c0_0 = arith.constant 0 : index
    %0 = vector.load %arg3[%c0, %c0_0] : memref<32x1024xf32, #tpu.memory_space<vmem>>, vector<32x1024xf32>
    %c0_1 = arith.constant 0 : index
    %c0_2 = arith.constant 0 : index
    %1 = vector.load %arg2[%c0_1, %c0_2] : memref<1024x4xf32, #tpu.memory_space<vmem>>, vector<1024x4xf32>
    %cst = arith.constant dense<0.000000e+00> : vector<32x4xf32>
    %2 = tpu.matmul %0, %1, %cst {dimension_numbers = #tpu.dot_dimension_numbers<[1], [0], [0], [1], [0, 0, 1, 1], [], []>} : vector<32x1024xf32>, vector<1024x4xf32>, vector<32x4xf32> -> vector<32x4xf32>
    %c0_3 = arith.constant 0 : index
    %c0_4 = arith.constant 0 : index
    %3 = vector.load %arg1[%c0_3, %c0_4] : memref<32x4xf32, #tpu.memory_space<vmem>>, vector<32x4xf32>
    %4 = arith.addf %2, %3 : vector<32x4xf32>
    %cst_5 = arith.constant dense<0xFF800000> : vector<32xf32>
    %5 = vector.multi_reduction <maximumf>, %4, %cst_5 [1] : vector<32x4xf32> to vector<32xf32>
    %6 = vector.shape_cast %5 : vector<32xf32> to vector<32x1xf32>
    %7 = vector.broadcast %6 : vector<32x1xf32> to vector<32x4xf32>
    %8 = arith.subf %4, %7 : vector<32x4xf32>
    %9 = math.exp %8 : vector<32x4xf32>
    %cst_6 = arith.constant dense<0.000000e+00> : vector<32xf32>
    %10 = vector.multi_reduction <add>, %9, %cst_6 [1] : vector<32x4xf32> to vector<32xf32>
    %11 = vector.shape_cast %10 : vector<32xf32> to vector<32x1xf32>
    %12 = vector.broadcast %11 : vector<32x1xf32> to vector<32x4xf32>
    %13 = arith.divf %9, %12 : vector<32x4xf32>
    %c0_7 = arith.constant 0 : index
    %c0_8 = arith.constant 0 : index
    %14 = vector.load %arg5[%c0_7, %c0_8] : memref<32x4xf32, #tpu.memory_space<vmem>>, vector<32x4xf32>
    tpu.vector_store %arg5[%c0_7, %c0_8], %13 {strides = array<i32>} : memref<32x4xf32, #tpu.memory_space<vmem>>, vector<32x4xf32>,
    %15 = vector.extract_strided_slice %13 {offsets = [0, 0], sizes = [32, 1], strides = [1, 1]} : vector<32x4xf32> to vector<32x1xf32>
    %16 = vector.extract_strided_slice %0 {offsets = [0, 0], sizes = [32, 256], strides = [1, 1]} : vector<32x1024xf32> to vector<32x256xf32>
    %17 = vector.broadcast %15 : vector<32x1xf32> to vector<32x256xf32>
    %18 = arith.mulf %17, %16 : vector<32x256xf32>
    %19 = vector.extract_strided_slice %13 {offsets = [0, 1], sizes = [32, 1], strides = [1, 1]} : vector<32x4xf32> to vector<32x1xf32>
    %20 = vector.extract_strided_slice %0 {offsets = [0, 256], sizes = [32, 256], strides = [1, 1]} : vector<32x1024xf32> to vector<32x256xf32>
    %21 = vector.broadcast %19 : vector<32x1xf32> to vector<32x256xf32>
    %22 = arith.mulf %21, %20 : vector<32x256xf32>
    %23 = arith.addf %18, %22 : vector<32x256xf32>
    %24 = vector.extract_strided_slice %13 {offsets = [0, 2], sizes = [32, 1], strides = [1, 1]} : vector<32x4xf32> to vector<32x1xf32>
    %25 = vector.extract_strided_slice %0 {offsets = [0, 512], sizes = [32, 256], strides = [1, 1]} : vector<32x1024xf32> to vector<32x256xf32>
    %26 = vector.broadcast %24 : vector<32x1xf32> to vector<32x256xf32>
    %27 = arith.mulf %26, %25 : vector<32x256xf32>
    %28 = arith.addf %23, %27 : vector<32x256xf32>
    %29 = vector.extract_strided_slice %13 {offsets = [0, 3], sizes = [32, 1], strides = [1, 1]} : vector<32x4xf32> to vector<32x1xf32>
    %30 = vector.extract_strided_slice %0 {offsets = [0, 768], sizes = [32, 256], strides = [1, 1]} : vector<32x1024xf32> to vector<32x256xf32>
    %31 = vector.broadcast %29 : vector<32x1xf32> to vector<32x256xf32>
    %32 = arith.mulf %31, %30 : vector<32x256xf32>
    %33 = arith.addf %28, %32 : vector<32x256xf32>
    %c0_9 = arith.constant 0 : index
    %c0_10 = arith.constant 0 : index
    %34 = vector.load %arg4[%c0_9, %c0_10] : memref<32x256xf32, #tpu.memory_space<vmem>>, vector<32x256xf32>
    tpu.vector_store %arg4[%c0_9, %c0_10], %33 {strides = array<i32>} : memref<32x256xf32, #tpu.memory_space<vmem>>, vector<32x256xf32>,
    return
  }
  func.func @transform_0(%arg0: i32) -> (i32, i32) {
    %c0_i32 = arith.constant 0 : i32
    %c0_i32_0 = arith.constant 0 : i32
    return %arg0, %c0_i32 : i32, i32
  }
  func.func @transform_1(%arg0: i32) -> (i32, i32) {
    %c0_i32 = arith.constant 0 : i32
    %c0_i32_0 = arith.constant 0 : i32
    %c0_i32_1 = arith.constant 0 : i32
    return %c0_i32, %c0_i32_0 : i32, i32
  }
  func.func @transform_2(%arg0: i32) -> (i32, i32) {
    %c0_i32 = arith.constant 0 : i32
    %c0_i32_0 = arith.constant 0 : i32
    return %arg0, %c0_i32 : i32, i32
  }
  func.func @transform_3(%arg0: i32) -> (i32, i32) {
    %c0_i32 = arith.constant 0 : i32
    %c0_i32_0 = arith.constant 0 : i32
    return %arg0, %c0_i32 : i32, i32
  }
  func.func @transform_4(%arg0: i32) -> (i32, i32) {
    %c0_i32 = arith.constant 0 : i32
    %c0_i32_0 = arith.constant 0 : i32
    return %arg0, %c0_i32 : i32, i32
  }
}

</mosaic_0001>

<llo_original>
// kernel: tpu_custom_call.1
$region0: #{tpu_custom_call.1}
  #allocation0 [shape = 'u32[]', space=smem, size = 0x4, offset = 0x4, fixed_abs, tag = 'smem constant byte address 0x4 - core index']
  #allocation1 [shape = 'u32[72,128]{1,0:T(1,128)}', space=vmem, size = 0x9000, scoped, tag = 'internal scratch']
  %s0 = inlined_call_operand.vmem [shape: f32[32,4], index: 0, kind: input, shape index: {}]
  %s1 = inlined_call_operand.vmem [shape: f32[1024,4], index: 1, kind: input, shape index: {}]
  %s2 = inlined_call_operand.vmem [shape: f32[32,1024], index: 2, kind: input, shape index: {}]
  %s3 = inlined_call_operand.hbm [shape: f32[32,256], index: 3, kind: output, shape index: {0}]
  %s4 = inlined_call_operand.vmem [shape: f32[32,4], index: 4, kind: output, shape index: {1}]
  %5 = xla_tuple %s3, %s4
  %s6 = sld [smem:[#allocation0]]
  $region30: #{tpu_custom_call.1} parent=0
    _
  %s8 = ssub.s32 1, %s6
  %s9 = scalar_select 0, %s8, %s6
  $region1: #{tpu_custom_call.1} parent=0
    #allocation2 [shape = 'u8[32768]{0}', space=vmem, size = 0x8000, scoped, tag = 'output window, operand 0, single buffered']
    #allocation3 [shape = 's32[1]{0}', space=sflag, size = 0x4, scoped, tag = 'scoped memory for tpu_custom_call.1']
    %10 = vsyncpa [#allocation3], 0
    // Predicated region
    $region2: #{tpu_custom_call.1} parent=1 // pred_check
      _
    $region3: #{tpu_custom_call.1} parent=1 // pred_check_branch
      %12 = sbr.rel (0) target = $region5
    $region4: #{tpu_custom_call.1} parent=1 // pred_region
      _
    $region5: #{tpu_custom_call.1} parent=1 // pred_fallthru
      _
    // Predicated region
    $region6: #{tpu_custom_call.1} parent=1 // pred_check
      _
    $region7: #{tpu_custom_call.1} parent=1 // pred_check_branch
      %14 = sbr.rel (0) target = $region9
    $region8: #{tpu_custom_call.1} parent=1 // pred_region
      _
    $region9: #{tpu_custom_call.1} parent=1 // pred_fallthru
      _
    // Predicated region
    $region10: #{tpu_custom_call.1} parent=1 // pred_check
      _
    $region11: #{tpu_custom_call.1} parent=1 // pred_check_branch
      %16 = sbr.rel (0) target = $region13
    $region12: #{tpu_custom_call.1} parent=1 // pred_region
      _
    $region13: #{tpu_custom_call.1} parent=1 // pred_fallthru
      _
    %v17 = vld [vmem:[%s2] sm:$0xff]
    %v18 = vld [vmem:[%s2 + $0x8] sm:$0xff]
    %v19 = vld [vmem:[%s2 + $0x10] sm:$0xff]
    %v20 = vld [vmem:[%s2 + $0x18] sm:$0xff]
    %v21 = vld [vmem:[%s2 + $0x20] sm:$0xff]
    %v22 = vld [vmem:[%s2 + $0x28] sm:$0xff]
    %v23 = vld [vmem:[%s2 + $0x30] sm:$0xff]
    %v24 = vld [vmem:[%s2 + $0x38] sm:$0xff]
    %v25 = vld [vmem:[%s2 + $0x40] sm:$0xff]
    %v26 = vld [vmem:[%s2 + $0x48] sm:$0xff]
    %v27 = vld [vmem:[%s2 + $0x50] sm:$0xff]
    %v28 = vld [vmem:[%s2 + $0x58] sm:$0xff]
    %v29 = vld [vmem:[%s2 + $0x60] sm:$0xff]
    %v30 = vld [vmem:[%s2 + $0x68] sm:$0xff]
    %v31 = vld [vmem:[%s2 + $0x70] sm:$0xff]
    %v32 = vld [vmem:[%s2 + $0x78] sm:$0xff]
    %v33 = vld [vmem:[%s2 + $0x80] sm:$0xff]
    %v34 = vld [vmem:[%s2 + $0x88] sm:$0xff]
    %v35 = vld [vmem:[%s2 + $0x90] sm:$0xff]
    %v36 = vld [vmem:[%s2 + $0x98] sm:$0xff]
    %v37 = vld [vmem:[%s2 + $0xa0] sm:$0xff]
    %v38 = vld [vmem:[%s2 + $0xa8] sm:$0xff]
    %v39 = vld [vmem:[%s2 + $0xb0] sm:$0xff]
    %v40 = vld [vmem:[%s2 + $0xb8] sm:$0xff]
    %v41 = vld [vmem:[%s2 + $0xc0] sm:$0xff]
    %v42 = vld [vmem:[%s2 + $0xc8] sm:$0xff]
    %v43 = vld [vmem:[%s2 + $0xd0] sm:$0xff]
    %v44 = vld [vmem:[%s2 + $0xd8] sm:$0xff]
    %v45 = vld [vmem:[%s2 + $0xe0] sm:$0xff]
    %v46 = vld [vmem:[%s2 + $0xe8] sm:$0xff]
    %v47 = vld [vmem:[%s2 + $0xf0] sm:$0xff]
    %v48 = vld [vmem:[%s2 + $0xf8] sm:$0xff]
    %v49 = vld [vmem:[%s1] sm:$0xff]
    %v50 = vld [vmem:[%s1 + $0x8] sm:$0xff]
    %v51 = vld [vmem:[%s1 + $0x10] sm:$0xff]
    %v52 = vld [vmem:[%s1 + $0x18] sm:$0xff]
    %v53 = vld [vmem:[%s1 + $0x20] sm:$0xff]
    %v54 = vld [vmem:[%s1 + $0x28] sm:$0xff]
    %v55 = vld [vmem:[%s1 + $0x30] sm:$0xff]
    %v56 = vld [vmem:[%s1 + $0x38] sm:$0xff]
    %v57 = vld [vmem:[%s1 + $0x40] sm:$0xff]
    %v58 = vld [vmem:[%s1 + $0x48] sm:$0xff]
    %v59 = vld [vmem:[%s1 + $0x50] sm:$0xff]
    %v60 = vld [vmem:[%s1 + $0x58] sm:$0xff]
    %v61 = vld [vmem:[%s1 + $0x60] sm:$0xff]
    %v62 = vld [vmem:[%s1 + $0x68] sm:$0xff]
    %v63 = vld [vmem:[%s1 + $0x70] sm:$0xff]
    %v64 = vld [vmem:[%s1 + $0x78] sm:$0xff]
    %v65 = vld [vmem:[%s1 + $0x80] sm:$0xff]
    %v66 = vld [vmem:[%s1 + $0x88] sm:$0xff]
    %v67 = vld [vmem:[%s1 + $0x90] sm:$0xff]
    %v68 = vld [vmem:[%s1 + $0x98] sm:$0xff]
    %v69 = vld [vmem:[%s1 + $0xa0] sm:$0xff]
    %v70 = vld [vmem:[%s1 + $0xa8] sm:$0xff]
    %v71 = vld [vmem:[%s1 + $0xb0] sm:$0xff]
    %v72 = vld [vmem:[%s1 + $0xb8] sm:$0xff]
    %v73 = vld [vmem:[%s1 + $0xc0] sm:$0xff]
    %v74 = vld [vmem:[%s1 + $0xc8] sm:$0xff]
    %v75 = vld [vmem:[%s1 + $0xd0] sm:$0xff]
    %v76 = vld [vmem:[%s1 + $0xd8] sm:$0xff]
    %v77 = vld [vmem:[%s1 + $0xe0] sm:$0xff]
    %v78 = vld [vmem:[%s1 + $0xe8] sm:$0xff]
    %v79 = vld [vmem:[%s1 + $0xf0] sm:$0xff]
    %v80 = vld [vmem:[%s1 + $0xf8] sm:$0xff]
    %v81 = vld [vmem:[%s1 + $0x100] sm:$0xff]
    %v82 = vld [vmem:[%s1 + $0x108] sm:$0xff]
    %v83 = vld [vmem:[%s1 + $0x110] sm:$0xff]
    %v84 = vld [vmem:[%s1 + $0x118] sm:$0xff]
    %v85 = vld [vmem:[%s1 + $0x120] sm:$0xff]
    %v86 = vld [vmem:[%s1 + $0x128] sm:$0xff]
    %v87 = vld [vmem:[%s1 + $0x130] sm:$0xff]
    %v88 = vld [vmem:[%s1 + $0x138] sm:$0xff]
    %v89 = vld [vmem:[%s1 + $0x140] sm:$0xff]
    %v90 = vld [vmem:[%s1 + $0x148] sm:$0xff]
    %v91 = vld [vmem:[%s1 + $0x150] sm:$0xff]
    %v92 = vld [vmem:[%s1 + $0x158] sm:$0xff]
    %v93 = vld [vmem:[%s1 + $0x160] sm:$0xff]
    %v94 = vld [vmem:[%s1 + $0x168] sm:$0xff]
    %v95 = vld [vmem:[%s1 + $0x170] sm:$0xff]
    %v96 = vld [vmem:[%s1 + $0x178] sm:$0xff]
    %v97 = vld [vmem:[%s1 + $0x180] sm:$0xff]
    %v98 = vld [vmem:[%s1 + $0x188] sm:$0xff]
    %v99 = vld [vmem:[%s1 + $0x190] sm:$0xff]
    %v100 = vld [vmem:[%s1 + $0x198] sm:$0xff]
    %v101 = vld [vmem:[%s1 + $0x1a0] sm:$0xff]
    %v102 = vld [vmem:[%s1 + $0x1a8] sm:$0xff]
    %v103 = vld [vmem:[%s1 + $0x1b0] sm:$0xff]
    %v104 = vld [vmem:[%s1 + $0x1b8] sm:$0xff]
    %v105 = vld [vmem:[%s1 + $0x1c0] sm:$0xff]
    %v106 = vld [vmem:[%s1 + $0x1c8] sm:$0xff]
    %v107 = vld [vmem:[%s1 + $0x1d0] sm:$0xff]
    %v108 = vld [vmem:[%s1 + $0x1d8] sm:$0xff]
    %v109 = vld [vmem:[%s1 + $0x1e0] sm:$0xff]
    %v110 = vld [vmem:[%s1 + $0x1e8] sm:$0xff]
    %v111 = vld [vmem:[%s1 + $0x1f0] sm:$0xff]
    %v112 = vld [vmem:[%s1 + $0x1f8] sm:$0xff]
    %v113 = vld [vmem:[%s1 + $0x200] sm:$0xff]
    %v114 = vld [vmem:[%s1 + $0x208] sm:$0xff]
    %v115 = vld [vmem:[%s1 + $0x210] sm:$0xff]
    %v116 = vld [vmem:[%s1 + $0x218] sm:$0xff]
    %v117 = vld [vmem:[%s1 + $0x220] sm:$0xff]
    %v118 = vld [vmem:[%s1 + $0x228] sm:$0xff]
    %v119 = vld [vmem:[%s1 + $0x230] sm:$0xff]
    %v120 = vld [vmem:[%s1 + $0x238] sm:$0xff]
    %v121 = vld [vmem:[%s1 + $0x240] sm:$0xff]
    %v122 = vld [vmem:[%s1 + $0x248] sm:$0xff]
    %v123 = vld [vmem:[%s1 + $0x250] sm:$0xff]
    %v124 = vld [vmem:[%s1 + $0x258] sm:$0xff]
    %v125 = vld [vmem:[%s1 + $0x260] sm:$0xff]
    %v126 = vld [vmem:[%s1 + $0x268] sm:$0xff]
    %v127 = vld [vmem:[%s1 + $0x270] sm:$0xff]
    %v128 = vld [vmem:[%s1 + $0x278] sm:$0xff]
    %v129 = vld [vmem:[%s1 + $0x280] sm:$0xff]
    %v130 = vld [vmem:[%s1 + $0x288] sm:$0xff]
    %v131 = vld [vmem:[%s1 + $0x290] sm:$0xff]
    %v132 = vld [vmem:[%s1 + $0x298] sm:$0xff]
    %v133 = vld [vmem:[%s1 + $0x2a0] sm:$0xff]
    %v134 = vld [vmem:[%s1 + $0x2a8] sm:$0xff]
    %v135 = vld [vmem:[%s1 + $0x2b0] sm:$0xff]
    %v136 = vld [vmem:[%s1 + $0x2b8] sm:$0xff]
    %v137 = vld [vmem:[%s1 + $0x2c0] sm:$0xff]
    %v138 = vld [vmem:[%s1 + $0x2c8] sm:$0xff]
    %v139 = vld [vmem:[%s1 + $0x2d0] sm:$0xff]
    %v140 = vld [vmem:[%s1 + $0x2d8] sm:$0xff]
    %v141 = vld [vmem:[%s1 + $0x2e0] sm:$0xff]
    %v142 = vld [vmem:[%s1 + $0x2e8] sm:$0xff]
    %v143 = vld [vmem:[%s1 + $0x2f0] sm:$0xff]
    %v144 = vld [vmem:[%s1 + $0x2f8] sm:$0xff]
    %v145 = vld [vmem:[%s1 + $0x300] sm:$0xff]
    %v146 = vld [vmem:[%s1 + $0x308] sm:$0xff]
    %v147 = vld [vmem:[%s1 + $0x310] sm:$0xff]
    %v148 = vld [vmem:[%s1 + $0x318] sm:$0xff]
    %v149 = vld [vmem:[%s1 + $0x320] sm:$0xff]
    %v150 = vld [vmem:[%s1 + $0x328] sm:$0xff]
    %v151 = vld [vmem:[%s1 + $0x330] sm:$0xff]
    %v152 = vld [vmem:[%s1 + $0x338] sm:$0xff]
    %v153 = vld [vmem:[%s1 + $0x340] sm:$0xff]
    %v154 = vld [vmem:[%s1 + $0x348] sm:$0xff]
    %v155 = vld [vmem:[%s1 + $0x350] sm:$0xff]
    %v156 = vld [vmem:[%s1 + $0x358] sm:$0xff]
    %v157 = vld [vmem:[%s1 + $0x360] sm:$0xff]
    %v158 = vld [vmem:[%s1 + $0x368] sm:$0xff]
    %v159 = vld [vmem:[%s1 + $0x370] sm:$0xff]
    %v160 = vld [vmem:[%s1 + $0x378] sm:$0xff]
    %v161 = vld [vmem:[%s1 + $0x380] sm:$0xff]
    %v162 = vld [vmem:[%s1 + $0x388] sm:$0xff]
    %v163 = vld [vmem:[%s1 + $0x390] sm:$0xff]
    %v164 = vld [vmem:[%s1 + $0x398] sm:$0xff]
    %v165 = vld [vmem:[%s1 + $0x3a0] sm:$0xff]
    %v166 = vld [vmem:[%s1 + $0x3a8] sm:$0xff]
    %v167 = vld [vmem:[%s1 + $0x3b0] sm:$0xff]
    %v168 = vld [vmem:[%s1 + $0x3b8] sm:$0xff]
    %v169 = vld [vmem:[%s1 + $0x3c0] sm:$0xff]
    %v170 = vld [vmem:[%s1 + $0x3c8] sm:$0xff]
    %v171 = vld [vmem:[%s1 + $0x3d0] sm:$0xff]
    %v172 = vld [vmem:[%s1 + $0x3d8] sm:$0xff]
    %v173 = vld [vmem:[%s1 + $0x3e0] sm:$0xff]
    %v174 = vld [vmem:[%s1 + $0x3e8] sm:$0xff]
    %v175 = vld [vmem:[%s1 + $0x3f0] sm:$0xff]
    %v176 = vld [vmem:[%s1 + $0x3f8] sm:$0xff]
    %v177 = vld [vmem:[%s0] sm:$0xff]
    %v178 = vld [vmem:[%s0 + $0x8] sm:$0xff]
    %v179 = vld [vmem:[%s0 + $0x10] sm:$0xff]
    %v180 = vld [vmem:[%s0 + $0x18] sm:$0xff]
    %181 = vmatpush.msra.mxu0 %v64
    %182 = vmatpush.msra.mxu0 %v63
    %183 = vmatpush.msra.mxu0 %v62
    %184 = vmatpush.msra.mxu0 %v61
    %185 = vmatpush.msra.mxu0 %v60
    %186 = vmatpush.msra.mxu0 %v59
    %187 = vmatpush.msra.mxu0 %v58
    %188 = vmatpush.msra.mxu0 %v57
    %189 = vmatpush.msra.mxu0 %v56
    %190 = vmatpush.msra.mxu0 %v55
    %191 = vmatpush.msra.mxu0 %v54
    %192 = vmatpush.msra.mxu0 %v53
    %193 = vmatpush.msra.mxu0 %v52
    %194 = vmatpush.msra.mxu0 %v51
    %195 = vmatpush.msra.mxu0 %v50
    %196 = vmatpush.msra.mxu0 %v49
    %197 = vmatmul.f32.gmra.mxu0 %v17
    %v198 = vpop.f32.mrf.mxu0
    %v199 = vadd.f32 %v177, %v198
    %200 = vmatmul.f32.gmra.mxu0 %v25
    %v201 = vpop.f32.mrf.mxu0
    %v202 = vadd.f32 %v178, %v201
    %203 = vmatmul.f32.gmra.mxu0 %v33
    %v204 = vpop.f32.mrf.mxu0
    %v205 = vadd.f32 %v179, %v204
    %206 = vmatmul.f32.gmra.mxu0 %v41
    %v207 = vpop.f32.mrf.mxu0
    %v208 = vadd.f32 %v180, %v207
    %209 = vdwg.mxu0
    %210 = vmatpush.msra.mxu0 %v80
    %211 = vmatpush.msra.mxu0 %v79
    %212 = vmatpush.msra.mxu0 %v78
    %213 = vmatpush.msra.mxu0 %v77
    %214 = vmatpush.msra.mxu0 %v76
    %215 = vmatpush.msra.mxu0 %v75
    %216 = vmatpush.msra.mxu0 %v74
    %217 = vmatpush.msra.mxu0 %v73
    %218 = vmatpush.msra.mxu0 %v72
    %219 = vmatpush.msra.mxu0 %v71
    %220 = vmatpush.msra.mxu0 %v70
    %221 = vmatpush.msra.mxu0 %v69
    %222 = vmatpush.msra.mxu0 %v68
    %223 = vmatpush.msra.mxu0 %v67
    %224 = vmatpush.msra.mxu0 %v66
    %225 = vmatpush.msra.mxu0 %v65
    %226 = vmatmul.f32.gmra.mxu0 %v18
    %v227 = vpop.f32.mrf.mxu0
    %v228 = vadd.f32 %v199, %v227
    %229 = vmatmul.f32.gmra.mxu0 %v26
    %v230 = vpop.f32.mrf.mxu0
    %v231 = vadd.f32 %v202, %v230
    %232 = vmatmul.f32.gmra.mxu0 %v34
    %v233 = vpop.f32.mrf.mxu0
    %v234 = vadd.f32 %v205, %v233
    %235 = vmatmul.f32.gmra.mxu0 %v42
    %v236 = vpop.f32.mrf.mxu0
    %v237 = vadd.f32 %v208, %v236
    %238 = vdwg.mxu0
    %239 = vmatpush.msra.mxu0 %v96
    %240 = vmatpush.msra.mxu0 %v95
    %241 = vmatpush.msra.mxu0 %v94
    %242 = vmatpush.msra.mxu0 %v93
    %243 = vmatpush.msra.mxu0 %v92
    %244 = vmatpush.msra.mxu0 %v91
    %245 = vmatpush.msra.mxu0 %v90
    %246 = vmatpush.msra.mxu0 %v89
    %247 = vmatpush.msra.mxu0 %v88
    %248 = vmatpush.msra.mxu0 %v87
    %249 = vmatpush.msra.mxu0 %v86
    %250 = vmatpush.msra.mxu0 %v85
    %251 = vmatpush.msra.mxu0 %v84
    %252 = vmatpush.msra.mxu0 %v83
    %253 = vmatpush.msra.mxu0 %v82
    %254 = vmatpush.msra.mxu0 %v81
    %255 = vmatmul.f32.gmra.mxu0 %v19
    %v256 = vpop.f32.mrf.mxu0
    %v257 = vadd.f32 %v228, %v256
    %258 = vmatmul.f32.gmra.mxu0 %v27
    %v259 = vpop.f32.mrf.mxu0
    %v260 = vadd.f32 %v231, %v259
    %261 = vmatmul.f32.gmra.mxu0 %v35
    %v262 = vpop.f32.mrf.mxu0
    %v263 = vadd.f32 %v234, %v262
    %264 = vmatmul.f32.gmra.mxu0 %v43
    %v265 = vpop.f32.mrf.mxu0
    %v266 = vadd.f32 %v237, %v265
    %267 = vdwg.mxu0
    %268 = vmatpush.msra.mxu0 %v112
    %269 = vmatpush.msra.mxu0 %v111
    %270 = vmatpush.msra.mxu0 %v110
    %271 = vmatpush.msra.mxu0 %v109
    %272 = vmatpush.msra.mxu0 %v108
    %273 = vmatpush.msra.mxu0 %v107
    %274 = vmatpush.msra.mxu0 %v106
    %275 = vmatpush.msra.mxu0 %v105
    %276 = vmatpush.msra.mxu0 %v104
    %277 = vmatpush.msra.mxu0 %v103
    %278 = vmatpush.msra.mxu0 %v102
    %279 = vmatpush.msra.mxu0 %v101
    %280 = vmatpush.msra.mxu0 %v100
    %281 = vmatpush.msra.mxu0 %v99
    %282 = vmatpush.msra.mxu0 %v98
    %283 = vmatpush.msra.mxu0 %v97
    %284 = vmatmul.f32.gmra.mxu0 %v20
    %v285 = vpop.f32.mrf.mxu0
    %v286 = vadd.f32 %v257, %v285
    %287 = vmatmul.f32.gmra.mxu0 %v28
    %v288 = vpop.f32.mrf.mxu0
    %v289 = vadd.f32 %v260, %v288
    %290 = vmatmul.f32.gmra.mxu0 %v36
    %v291 = vpop.f32.mrf.mxu0
    %v292 = vadd.f32 %v263, %v291
    %293 = vmatmul.f32.gmra.mxu0 %v44
    %v294 = vpop.f32.mrf.mxu0
    %v295 = vadd.f32 %v266, %v294
    %296 = vdwg.mxu0
    %297 = vmatpush.msra.mxu0 %v128
    %298 = vmatpush.msra.mxu0 %v127
    %299 = vmatpush.msra.mxu0 %v126
    %300 = vmatpush.msra.mxu0 %v125
    %301 = vmatpush.msra.mxu0 %v124
    %302 = vmatpush.msra.mxu0 %v123
    %303 = vmatpush.msra.mxu0 %v122
    %304 = vmatpush.msra.mxu0 %v121
    %305 = vmatpush.msra.mxu0 %v120
    %306 = vmatpush.msra.mxu0 %v119
    %307 = vmatpush.msra.mxu0 %v118
    %308 = vmatpush.msra.mxu0 %v117
    %309 = vmatpush.msra.mxu0 %v116
    %310 = vmatpush.msra.mxu0 %v115
    %311 = vmatpush.msra.mxu0 %v114
    %312 = vmatpush.msra.mxu0 %v113
    %313 = vmatmul.f32.gmra.mxu0 %v21
    %v314 = vpop.f32.mrf.mxu0
    %v315 = vadd.f32 %v286, %v314
    %316 = vmatmul.f32.gmra.mxu0 %v29
    %v317 = vpop.f32.mrf.mxu0
    %v318 = vadd.f32 %v289, %v317
    %319 = vmatmul.f32.gmra.mxu0 %v37
    %v320 = vpop.f32.mrf.mxu0
    %v321 = vadd.f32 %v292, %v320
    %322 = vmatmul.f32.gmra.mxu0 %v45
    %v323 = vpop.f32.mrf.mxu0
    %v324 = vadd.f32 %v295, %v323
    %325 = vdwg.mxu0
    %326 = vmatpush.msra.mxu0 %v144
    %327 = vmatpush.msra.mxu0 %v143
    %328 = vmatpush.msra.mxu0 %v142
    %329 = vmatpush.msra.mxu0 %v141
    %330 = vmatpush.msra.mxu0 %v140
    %331 = vmatpush.msra.mxu0 %v139
    %332 = vmatpush.msra.mxu0 %v138
    %333 = vmatpush.msra.mxu0 %v137
    %334 = vmatpush.msra.mxu0 %v136
    %335 = vmatpush.msra.mxu0 %v135
    %336 = vmatpush.msra.mxu0 %v134
    %337 = vmatpush.msra.mxu0 %v133
    %338 = vmatpush.msra.mxu0 %v132
    %339 = vmatpush.msra.mxu0 %v131
    %340 = vmatpush.msra.mxu0 %v130
    %341 = vmatpush.msra.mxu0 %v129
    %342 = vmatmul.f32.gmra.mxu0 %v22
    %v343 = vpop.f32.mrf.mxu0
    %v344 = vadd.f32 %v315, %v343
    %345 = vmatmul.f32.gmra.mxu0 %v30
    %v346 = vpop.f32.mrf.mxu0
    %v347 = vadd.f32 %v318, %v346
    %348 = vmatmul.f32.gmra.mxu0 %v38
    %v349 = vpop.f32.mrf.mxu0
    %v350 = vadd.f32 %v321, %v349
    %351 = vmatmul.f32.gmra.mxu0 %v46
    %v352 = vpop.f32.mrf.mxu0
    %v353 = vadd.f32 %v324, %v352
    %354 = vdwg.mxu0
    %355 = vmatpush.msra.mxu0 %v160
    %356 = vmatpush.msra.mxu0 %v159
    %357 = vmatpush.msra.mxu0 %v158
    %358 = vmatpush.msra.mxu0 %v157
    %359 = vmatpush.msra.mxu0 %v156
    %360 = vmatpush.msra.mxu0 %v155
    %361 = vmatpush.msra.mxu0 %v154
    %362 = vmatpush.msra.mxu0 %v153
    %363 = vmatpush.msra.mxu0 %v152
    %364 = vmatpush.msra.mxu0 %v151
    %365 = vmatpush.msra.mxu0 %v150
    %366 = vmatpush.msra.mxu0 %v149
    %367 = vmatpush.msra.mxu0 %v148
    %368 = vmatpush.msra.mxu0 %v147
    %369 = vmatpush.msra.mxu0 %v146
    %370 = vmatpush.msra.mxu0 %v145
    %371 = vmatmul.f32.gmra.mxu0 %v23
    %v372 = vpop.f32.mrf.mxu0
    %v373 = vadd.f32 %v344, %v372
    %374 = vmatmul.f32.gmra.mxu0 %v31
    %v375 = vpop.f32.mrf.mxu0
    %v376 = vadd.f32 %v347, %v375
    %377 = vmatmul.f32.gmra.mxu0 %v39
    %v378 = vpop.f32.mrf.mxu0
    %v379 = vadd.f32 %v350, %v378
    %380 = vmatmul.f32.gmra.mxu0 %v47
    %v381 = vpop.f32.mrf.mxu0
    %v382 = vadd.f32 %v353, %v381
    %383 = vdwg.mxu0
    %384 = vmatpush.msra.mxu0 %v176
    %385 = vmatpush.msra.mxu0 %v175
    %386 = vmatpush.msra.mxu0 %v174
    %387 = vmatpush.msra.mxu0 %v173
    %388 = vmatpush.msra.mxu0 %v172
    %389 = vmatpush.msra.mxu0 %v171
    %390 = vmatpush.msra.mxu0 %v170
    %391 = vmatpush.msra.mxu0 %v169
    %392 = vmatpush.msra.mxu0 %v168
    %393 = vmatpush.msra.mxu0 %v167
    %394 = vmatpush.msra.mxu0 %v166
    %395 = vmatpush.msra.mxu0 %v165
    %396 = vmatpush.msra.mxu0 %v164
    %397 = vmatpush.msra.mxu0 %v163
    %398 = vmatpush.msra.mxu0 %v162
    %399 = vmatpush.msra.mxu0 %v161
    %400 = vmatmul.f32.gmra.mxu0 %v24
    %v401 = vpop.f32.mrf.mxu0
    %v402 = vadd.f32 %v373, %v401
    %403 = vmatmul.f32.gmra.mxu0 %v32
    %v404 = vpop.f32.mrf.mxu0
    %v405 = vadd.f32 %v376, %v404
    %406 = vmatmul.f32.gmra.mxu0 %v40
    %v407 = vpop.f32.mrf.mxu0
    %v408 = vadd.f32 %v379, %v407
    %409 = vmatmul.f32.gmra.mxu0 %v48
    %v410 = vpop.f32.mrf.mxu0
    %v411 = vadd.f32 %v382, %v410
    %412 = vdwg.mxu0
    %vm413 = vcmask 31744
    %v414 = vsel %vm413, %v402, -inf
    %415 = vmax.xlane.f32.xlu0 %v414
    %v416 = vpop.xlane.xlu0 %415
    %v417 = vsel %vm413, %v405, -inf
    %418 = vmax.xlane.f32.xlu0 %v417
    %v419 = vpop.xlane.xlu0 %418
    %v420 = vsel %vm413, %v408, -inf
    %421 = vmax.xlane.f32.xlu0 %v420
    %v422 = vpop.xlane.xlu0 %421
    %v423 = vsel %vm413, %v411, -inf
    %424 = vmax.xlane.f32.xlu0 %v423
    %v425 = vpop.xlane.xlu0 %424
    %v426 = vsub.f32 %v402, %v416
    %v427 = vsub.f32 %v405, %v419
    %v428 = vsub.f32 %v408, %v422
    %v429 = vsub.f32 %v411, %v425
    %v430 = vmul.f32 %v426, 1.442695
    %v431 = vpow.pop %v430
    %v432 = vmul.f32 %v427, 1.442695
    %v433 = vpow.pop %v432
    %v434 = vmul.f32 %v428, 1.442695
    %v435 = vpow.pop %v434
    %v436 = vmul.f32 %v429, 1.442695
    %v437 = vpow.pop %v436
    %v438 = vsel %vm413, %v431, 0.0
    %439 = vadd.xlane.f32.xlu0 %v438
    %v440 = vpop.xlane.xlu0 %439
    %v441 = vsel %vm413, %v433, 0.0
    %442 = vadd.xlane.f32.xlu0 %v441
    %v443 = vpop.xlane.xlu0 %442
    %v444 = vsel %vm413, %v435, 0.0
    %445 = vadd.xlane.f32.xlu0 %v444
    %v446 = vpop.xlane.xlu0 %445
    %v447 = vsel %vm413, %v437, 0.0
    %448 = vadd.xlane.f32.xlu0 %v447
    %v449 = vpop.xlane.xlu0 %448
    %v450 = vrcp.pop %v440
    %v451 = vmul.f32 %v440, %v450
    %v452 = vsub.f32 1.0, %v451
    %v453 = vmul.f32 %v450, %v452
    %v454 = vadd.f32 %v450, %v453
    %vm455 = vweird.f32 %v440
    %vm456 = vweird.f32 %v450
    %vm457 = vmor %vm455, %vm456
    %v458 = vsel %vm457, %v450, %v454
    %v459 = vand.u32 2147483647, %v440
    %vm460 = vcmp.eq.f32.partialorder %v459, 8.507059e+37
    %v461 = vand.u32 %v440, 2147483648
    %v462 = vor.u32 1.1754944e-38, %v461
    %v463 = vsel %vm460, %v462, %v458
    %v464 = vmul.f32 %v431, %v463
    %v465 = vrcp.pop %v443
    %v466 = vmul.f32 %v443, %v465
    %v467 = vsub.f32 1.0, %v466
    %v468 = vmul.f32 %v465, %v467
    %v469 = vadd.f32 %v465, %v468
    %vm470 = vweird.f32 %v443
    %vm471 = vweird.f32 %v465
    %vm472 = vmor %vm470, %vm471
    %v473 = vsel %vm472, %v465, %v469
    %v474 = vand.u32 2147483647, %v443
    %vm475 = vcmp.eq.f32.partialorder %v474, 8.507059e+37
    %v476 = vand.u32 %v443, 2147483648
    %v477 = vor.u32 1.1754944e-38, %v476
    %v478 = vsel %vm475, %v477, %v473
    %v479 = vmul.f32 %v433, %v478
    %v480 = vrcp.pop %v446
    %v481 = vmul.f32 %v446, %v480
    %v482 = vsub.f32 1.0, %v481
    %v483 = vmul.f32 %v480, %v482
    %v484 = vadd.f32 %v480, %v483
    %vm485 = vweird.f32 %v446
    %vm486 = vweird.f32 %v480
    %vm487 = vmor %vm485, %vm486
    %v488 = vsel %vm487, %v480, %v484
    %v489 = vand.u32 2147483647, %v446
    %vm490 = vcmp.eq.f32.partialorder %v489, 8.507059e+37
    %v491 = vand.u32 %v446, 2147483648
    %v492 = vor.u32 1.1754944e-38, %v491
    %v493 = vsel %vm490, %v492, %v488
    %v494 = vmul.f32 %v435, %v493
    %v495 = vrcp.pop %v449
    %v496 = vmul.f32 %v449, %v495
    %v497 = vsub.f32 1.0, %v496
    %v498 = vmul.f32 %v495, %v497
    %v499 = vadd.f32 %v495, %v498
    %vm500 = vweird.f32 %v449
    %vm501 = vweird.f32 %v495
    %vm502 = vmor %vm500, %vm501
    %v503 = vsel %vm502, %v495, %v499
    %v504 = vand.u32 2147483647, %v449
    %vm505 = vcmp.eq.f32.partialorder %v504, 8.507059e+37
    %v506 = vand.u32 %v449, 2147483648
    %v507 = vor.u32 1.1754944e-38, %v506
    %v508 = vsel %vm505, %v507, %v503
    %v509 = vmul.f32 %v437, %v508
    %510 = vst.msk [vmem:[%s4] sm:$0xff] %vm413, %v464
    %511 = vst.msk [vmem:[%s4 + $0x8] sm:$0xff] %vm413, %v479
    %512 = vst.msk [vmem:[%s4 + $0x10] sm:$0xff] %vm413, %v494
    %513 = vst.msk [vmem:[%s4 + $0x18] sm:$0xff] %vm413, %v509
    %515 = vset.pattern.permute.xlu0 0
    %516 = vperm.xlu0 %515, %v464
    %v517 = vpop.permute.xlu0 %516
    %520 = vset.pattern.permute.xlu0 0
    %521 = vperm.xlu0 %520, %v479
    %v522 = vpop.permute.xlu0 %521
    %525 = vset.pattern.permute.xlu0 0
    %526 = vperm.xlu0 %525, %v494
    %v527 = vpop.permute.xlu0 %526
    %530 = vset.pattern.permute.xlu0 0
    %531 = vperm.xlu0 %530, %v509
    %v532 = vpop.permute.xlu0 %531
    %v534 = vmul.f32 %v517, %v17
    %v535 = vmul.f32 %v517, %v18
    %v536 = vmul.f32 %v522, %v25
    %v537 = vmul.f32 %v522, %v26
    %v538 = vmul.f32 %v527, %v33
    %v539 = vmul.f32 %v527, %v34
    %v540 = vmul.f32 %v532, %v41
    %v541 = vmul.f32 %v532, %v42
    %542 = vset.pattern.permute.xlu0 1
    %543 = vperm.xlu0 %542, %v464
    %v544 = vpop.permute.xlu0 %543
    %546 = vset.pattern.permute.xlu0 1
    %547 = vperm.xlu0 %546, %v479
    %v548 = vpop.permute.xlu0 %547
    %550 = vset.pattern.permute.xlu0 1
    %551 = vperm.xlu0 %550, %v494
    %v552 = vpop.permute.xlu0 %551
    %554 = vset.pattern.permute.xlu0 1
    %555 = vperm.xlu0 %554, %v509
    %v556 = vpop.permute.xlu0 %555
    %v558 = vmul.f32 %v544, %v19
    %v559 = vmul.f32 %v544, %v20
    %v560 = vmul.f32 %v548, %v27
    %v561 = vmul.f32 %v548, %v28
    %v562 = vmul.f32 %v552, %v35
    %v563 = vmul.f32 %v552, %v36
    %v564 = vmul.f32 %v556, %v43
    %v565 = vmul.f32 %v556, %v44
    %v566 = vadd.f32 %v534, %v558
    %v567 = vadd.f32 %v535, %v559
    %v568 = vadd.f32 %v536, %v560
    %v569 = vadd.f32 %v537, %v561
    %v570 = vadd.f32 %v538, %v562
    %v571 = vadd.f32 %v539, %v563
    %v572 = vadd.f32 %v540, %v564
    %v573 = vadd.f32 %v541, %v565
    %574 = vset.pattern.permute.xlu0 2
    %575 = vperm.xlu0 %574, %v464
    %v576 = vpop.permute.xlu0 %575
    %578 = vset.pattern.permute.xlu0 2
    %579 = vperm.xlu0 %578, %v479
    %v580 = vpop.permute.xlu0 %579
    %582 = vset.pattern.permute.xlu0 2
    %583 = vperm.xlu0 %582, %v494
    %v584 = vpop.permute.xlu0 %583
    %586 = vset.pattern.permute.xlu0 2
    %587 = vperm.xlu0 %586, %v509
    %v588 = vpop.permute.xlu0 %587
    %v590 = vmul.f32 %v576, %v21
    %v591 = vmul.f32 %v576, %v22
    %v592 = vmul.f32 %v580, %v29
    %v593 = vmul.f32 %v580, %v30
    %v594 = vmul.f32 %v584, %v37
    %v595 = vmul.f32 %v584, %v38
    %v596 = vmul.f32 %v588, %v45
    %v597 = vmul.f32 %v588, %v46
    %v598 = vadd.f32 %v566, %v590
    %v599 = vadd.f32 %v567, %v591
    %v600 = vadd.f32 %v568, %v592
    %v601 = vadd.f32 %v569, %v593
    %v602 = vadd.f32 %v570, %v594
    %v603 = vadd.f32 %v571, %v595
    %v604 = vadd.f32 %v572, %v596
    %v605 = vadd.f32 %v573, %v597
    %606 = vset.pattern.permute.xlu0 3
    %607 = vperm.xlu0 %606, %v464
    %v608 = vpop.permute.xlu0 %607
    %610 = vset.pattern.permute.xlu0 3
    %611 = vperm.xlu0 %610, %v479
    %v612 = vpop.permute.xlu0 %611
    %614 = vset.pattern.permute.xlu0 3
    %615 = vperm.xlu0 %614, %v494
    %v616 = vpop.permute.xlu0 %615
    %618 = vset.pattern.permute.xlu0 3
    %619 = vperm.xlu0 %618, %v509
    %v620 = vpop.permute.xlu0 %619
    %v622 = vmul.f32 %v608, %v23
    %v623 = vmul.f32 %v608, %v24
    %v624 = vmul.f32 %v612, %v31
    %v625 = vmul.f32 %v612, %v32
    %v626 = vmul.f32 %v616, %v39
    %v627 = vmul.f32 %v616, %v40
    %v628 = vmul.f32 %v620, %v47
    %v629 = vmul.f32 %v620, %v48
    %v630 = vadd.f32 %v598, %v622
    %v631 = vadd.f32 %v599, %v623
    %v632 = vadd.f32 %v600, %v624
    %v633 = vadd.f32 %v601, %v625
    %v634 = vadd.f32 %v602, %v626
    %v635 = vadd.f32 %v603, %v627
    %v636 = vadd.f32 %v604, %v628
    %v637 = vadd.f32 %v605, %v629
    %638 = vst [vmem:[#allocation2] sm:$0xff] %v630
    %639 = vst [vmem:[#allocation2 + $0x8] sm:$0xff] %v631
    %640 = vst [vmem:[#allocation2 + $0x10] sm:$0xff] %v632
    %641 = vst [vmem:[#allocation2 + $0x18] sm:$0xff] %v633
    %642 = vst [vmem:[#allocation2 + $0x20] sm:$0xff] %v634
    %643 = vst [vmem:[#allocation2 + $0x28] sm:$0xff] %v635
    %644 = vst [vmem:[#allocation2 + $0x30] sm:$0xff] %v636
    %645 = vst [vmem:[#allocation2 + $0x38] sm:$0xff] %v637
    // Predicated region
    $region14: #{tpu_custom_call.1} parent=1 // pred_check
      _
    $region15: #{tpu_custom_call.1} parent=1 // pred_check_branch
      %647 = sbr.rel (0) target = $region17
    $region16: #{tpu_custom_call.1} parent=1 // pred_region
      %649 = vsyncadd [#allocation3], 0
      %s650 = sshll.u32 [#allocation2], 4
      %s651 = int_to_ptr.vmem [resolvable:$true] %s650
      %s652 = sshll.u32 %s3, 4
      %s653 = int_to_ptr.hbm [resolvable:$true] %s652
      %658 = dma.vmem_to_hbm [thread:$0]  %s651, 1024, %s653, [#allocation3], 256, 256, 16
    $region17: #{tpu_custom_call.1} parent=1 // pred_fallthru
      _
    // Predicated region
    $region18: #{tpu_custom_call.1} parent=1 // pred_check
      _
    $region19: #{tpu_custom_call.1} parent=1 // pred_check_branch
      %660 = sbr.rel (0) target = $region21
    $region20: #{tpu_custom_call.1} parent=1 // pred_region
      _
    $region21: #{tpu_custom_call.1} parent=1 // pred_fallthru
      _
    // Predicated region
    $region22: #{tpu_custom_call.1} parent=1 // pred_check
      _
    $region23: #{tpu_custom_call.1} parent=1 // pred_check_branch
      %662 = sbr.rel (0) target = $region25
    $region24: #{tpu_custom_call.1} parent=1 // pred_region
      %664 = dma.done [#allocation3], 1024
    $region25: #{tpu_custom_call.1} parent=1 // pred_fallthru
      _
    // Predicated region
    $region26: #{tpu_custom_call.1} parent=1 // pred_check
      _
    $region27: #{tpu_custom_call.1} parent=1 // pred_check_branch
      %666 = sbr.rel (0) target = $region29
    $region28: #{tpu_custom_call.1} parent=1 // pred_region
      _
    $region29: #{tpu_custom_call.1} parent=1 // pred_fallthru
      _
    %667 = vsyncpa [#allocation3], 1

</llo_original>
